<compile_context>
chip_gen: v7x
topology: tpu7x:2x2x1
jax: 0.10.0
libtpu: 0.0.40
codegen_flags: <defaults>
</compile_context>

<pallas_src>
import jax
import jax.numpy as jnp
from jax.experimental import pallas as pl
from jax.experimental.pallas import tpu as pltpu


def _round_up(x, m):
    return (x + m - 1) // m * m


def actor_kernel(x_ref, w1_ref, b1_ref, w2_ref, b2_ref, w3_ref, b3_ref,
                 scale_ref, shift_ref, o_ref):
    # fc1 + relu  (bf16 operands, f32 accumulation on the MXU)
    h1 = jnp.dot(x_ref[...], w1_ref[...], preferred_element_type=jnp.float32)
    h1 = jnp.maximum(h1 + b1_ref[...], 0.0)
    # fc2 + relu
    h2 = jnp.dot(h1.astype(jnp.bfloat16), w2_ref[...],
                 preferred_element_type=jnp.float32)
    h2 = jnp.maximum(h2 + b2_ref[...], 0.0)
    # fc3 + tanh
    h3 = jnp.dot(h2.astype(jnp.bfloat16), w3_ref[...],
                 preferred_element_type=jnp.float32)
    h3 = jnp.tanh(h3 + b3_ref[...])
    # low + (high - low) * (h3 + 1) / 2  ==  h3 * scale + shift  (one FMA)
    o_ref[...] = h3 * scale_ref[...] + shift_ref[...]


def actor_forward(x, params, tile_b=512):
    """x: (B, input_dim) f32. params: dict from init_actor_params."""
    B, in_dim = x.shape
    din_p = params["w1"].shape[0]
    hid_p = params["w2"].shape[1]
    dout_p = params["w3"].shape[1]
    out_dim = params["out_dim"]

    # Batch tile: multiple of 8 sublanes, capped at tile_b; pad B to a multiple.
    tb = min(tile_b, _round_up(B, 8))
    b_pad = _round_up(B, tb)

    # Pad batch/features with zeros and downcast to bf16 for the MXU.
    xp = jnp.zeros((b_pad, din_p), jnp.bfloat16)
    xp = xp.at[:B, :in_dim].set(x.astype(jnp.bfloat16))

    def resident(shape):
        # Same block every grid step -> stays VMEM-resident (no re-DMA).
        return pl.BlockSpec(shape, lambda i: (0, 0))

    out = pl.pallas_call(
        actor_kernel,
        out_shape=jax.ShapeDtypeStruct((b_pad, dout_p), jnp.float32),
        grid=(b_pad // tb,),
        in_specs=[
            pl.BlockSpec((tb, din_p), lambda i: (i, 0)),   # x: tiled over batch
            resident((din_p, din_p)),                      # w1
            resident((1, din_p)),                          # b1
            resident((din_p, hid_p)),                      # w2
            resident((1, hid_p)),                          # b2
            resident((hid_p, dout_p)),                     # w3
            resident((1, dout_p)),                         # b3
            resident((1, dout_p)),                         # scale
            resident((1, dout_p)),                         # shift
        ],
        out_specs=pl.BlockSpec((tb, dout_p), lambda i: (i, 0)),
        compiler_params=pltpu.CompilerParams(
            dimension_semantics=("parallel",),
            vmem_limit_bytes=32 * 1024 * 1024,
        ),
    )(xp, params["w1"], params["b1"], params["w2"], params["b2"],
      params["w3"], params["b3"], params["scale"], params["shift"])

    return out[:B, :out_dim]


def init_actor_params(key, input_dim, output_dim, output_low, output_high,
                      hidden_dim=1024):
    """PyTorch-style uniform fan-in init; weights stored transposed (in,out),
    zero-padded to lane-friendly sizes and cast to bf16 for the kernel."""
    din_p = _round_up(input_dim, 128)
    hid_p = _round_up(hidden_dim, 256)
    dout_p = _round_up(output_dim, 128)

    ks = jax.random.split(key, 6)

    def linear(kw, kb, fan_in, fan_out, pad_in, pad_out):
        bound = 1.0 / jnp.sqrt(fan_in)
        w = jax.random.uniform(kw, (fan_in, fan_out), jnp.float32, -bound, bound)
        b = jax.random.uniform(kb, (fan_out,), jnp.float32, -bound, bound)
        wp = jnp.zeros((pad_in, pad_out), jnp.float32)
        wp = wp.at[:fan_in, :fan_out].set(w).astype(jnp.bfloat16)
        bp = jnp.zeros((1, pad_out), jnp.float32).at[0, :fan_out].set(b)
        return w, b, wp, bp

    w1, b1, w1p, b1p = linear(ks[0], ks[1], input_dim, input_dim, din_p, din_p)
    w2, b2, w2p, b2p = linear(ks[2], ks[3], input_dim, hidden_dim, din_p, hid_p)
    w3, b3, w3p, b3p = linear(ks[4], ks[5], hidden_dim, output_dim, hid_p, dout_p)

    low = jnp.asarray(output_low, jnp.float32).reshape(-1)
    high = jnp.asarray(output_high, jnp.float32).reshape(-1)
    scale = jnp.zeros((1, dout_p), jnp.float32)
    scale = scale.at[0, :output_dim].set((high - low) * 0.5)
    shift = jnp.zeros((1, dout_p), jnp.float32)
    shift = shift.at[0, :output_dim].set((low + high) * 0.5)

    return dict(
        # padded bf16/f32 kernel operands
        w1=w1p, b1=b1p, w2=w2p, b2=b2p, w3=w3p, b3=b3p,
        scale=scale, shift=shift, out_dim=output_dim,
        # unpadded f32 copies for the pure-JAX reference
        ref=dict(w1=w1, b1=b1, w2=w2, b2=b2, w3=w3, b3=b3, low=low, high=high),
    )


def actor_reference(x, ref):
    h1 = jnp.maximum(x @ ref["w1"] + ref["b1"], 0.0)
    h2 = jnp.maximum(h1 @ ref["w2"] + ref["b2"], 0.0)
    h3 = jnp.tanh(h2 @ ref["w3"] + ref["b3"])
    return ref["low"] + (ref["high"] - ref["low"]) * (h3 + 1.0) / 2.0


if __name__ == "__main__":
    B, input_dim, output_dim = 2, 32, 8

    key = jax.random.PRNGKey(0)
    k_x, k_p = jax.random.split(key)

    x = jax.random.normal(k_x, (B, input_dim), jnp.float32)
    output_low = -2.0 * jnp.ones((output_dim,), jnp.float32)
    output_high = 2.0 * jnp.ones((output_dim,), jnp.float32)

    params = init_actor_params(k_p, input_dim, output_dim, output_low, output_high)

    out = actor_forward(x, params)
    out = jax.block_until_ready(out)

    ref = actor_reference(x, params["ref"])
    assert out.shape == (B, output_dim)
    # bf16 matmul operands (f32 accumulation) vs f32 reference -> loose tolerance.
    assert jnp.allclose(out, ref, atol=5e-2, rtol=5e-2), "mismatch vs reference"

    print("KERNEL_OK")
</pallas_src>

<mosaic_0001>
module attributes {stable_mosaic.version = 11 : i64} {
  func.func @actor_kernel(%arg0: i32, %arg1: memref<8x128xbf16, #tpu.memory_space<vmem>>, %arg2: memref<128x128xbf16, #tpu.memory_space<vmem>>, %arg3: memref<1x128xf32, #tpu.memory_space<vmem>>, %arg4: memref<128x1024xbf16, #tpu.memory_space<vmem>>, %arg5: memref<1x1024xf32, #tpu.memory_space<vmem>>, %arg6: memref<1024x128xbf16, #tpu.memory_space<vmem>>, %arg7: memref<1x128xf32, #tpu.memory_space<vmem>>, %arg8: memref<1x128xf32, #tpu.memory_space<vmem>>, %arg9: memref<1x128xf32, #tpu.memory_space<vmem>>, %arg10: memref<8x128xf32, #tpu.memory_space<vmem>>) attributes {dimension_semantics = [#tpu.dimension_semantics<parallel>], iteration_bounds = array<i64: 1>, scalar_prefetch = 0 : i64, scratch_operands = 0 : i64, tpu.core_type = #tpu.core_type<tc>, window_params = [{transform_indices = @transform_0, window_bounds = array<i64: 8, 128>}, {pipeline_mode = #tpu.pipeline_mode<synchronous>, transform_indices = @transform_1, window_bounds = array<i64: 128, 128>}, {pipeline_mode = #tpu.pipeline_mode<synchronous>, transform_indices = @transform_2, window_bounds = array<i64: 1, 128>}, {pipeline_mode = #tpu.pipeline_mode<synchronous>, transform_indices = @transform_3, window_bounds = array<i64: 128, 1024>}, {pipeline_mode = #tpu.pipeline_mode<synchronous>, transform_indices = @transform_4, window_bounds = array<i64: 1, 1024>}, {pipeline_mode = #tpu.pipeline_mode<synchronous>, transform_indices = @transform_5, window_bounds = array<i64: 1024, 128>}, {pipeline_mode = #tpu.pipeline_mode<synchronous>, transform_indices = @transform_6, window_bounds = array<i64: 1, 128>}, {pipeline_mode = #tpu.pipeline_mode<synchronous>, transform_indices = @transform_7, window_bounds = array<i64: 1, 128>}, {pipeline_mode = #tpu.pipeline_mode<synchronous>, transform_indices = @transform_8, window_bounds = array<i64: 1, 128>}, {transform_indices = @transform_9, window_bounds = array<i64: 8, 128>}]} {
    %c0 = arith.constant 0 : index
    %c0_0 = arith.constant 0 : index
    %0 = vector.load %arg1[%c0, %c0_0] : memref<8x128xbf16, #tpu.memory_space<vmem>>, vector<8x128xbf16>
    %c0_1 = arith.constant 0 : index
    %c0_2 = arith.constant 0 : index
    %1 = vector.load %arg2[%c0_1, %c0_2] : memref<128x128xbf16, #tpu.memory_space<vmem>>, vector<128x128xbf16>
    %cst = arith.constant dense<0.000000e+00> : vector<8x128xf32>
    %2 = tpu.matmul %0, %1, %cst {dimension_numbers = #tpu.dot_dimension_numbers<[1], [0], [0], [1], [0, 0, 1, 1], [], []>} : vector<8x128xbf16>, vector<128x128xbf16>, vector<8x128xf32> -> vector<8x128xf32>
    %c0_3 = arith.constant 0 : index
    %c0_4 = arith.constant 0 : index
    %3 = vector.load %arg3[%c0_3, %c0_4] : memref<1x128xf32, #tpu.memory_space<vmem>>, vector<1x128xf32>
    %4 = vector.broadcast %3 : vector<1x128xf32> to vector<8x128xf32>
    %5 = arith.addf %2, %4 : vector<8x128xf32>
    %cst_5 = arith.constant 0.000000e+00 : f32
    %6 = vector.broadcast %cst_5 : f32 to vector<8x128xf32>
    %7 = arith.maximumf %5, %6 : vector<8x128xf32>
    %8 = arith.truncf %7 : vector<8x128xf32> to vector<8x128xbf16>
    %c0_6 = arith.constant 0 : index
    %c0_7 = arith.constant 0 : index
    %9 = vector.load %arg4[%c0_6, %c0_7] : memref<128x1024xbf16, #tpu.memory_space<vmem>>, vector<128x1024xbf16>
    %cst_8 = arith.constant dense<0.000000e+00> : vector<8x1024xf32>
    %10 = tpu.matmul %8, %9, %cst_8 {dimension_numbers = #tpu.dot_dimension_numbers<[1], [0], [0], [1], [0, 0, 1, 1], [], []>} : vector<8x128xbf16>, vector<128x1024xbf16>, vector<8x1024xf32> -> vector<8x1024xf32>
    %c0_9 = arith.constant 0 : index
    %c0_10 = arith.constant 0 : index
    %11 = vector.load %arg5[%c0_9, %c0_10] : memref<1x1024xf32, #tpu.memory_space<vmem>>, vector<1x1024xf32>
    %12 = vector.broadcast %11 : vector<1x1024xf32> to vector<8x1024xf32>
    %13 = arith.addf %10, %12 : vector<8x1024xf32>
    %cst_11 = arith.constant 0.000000e+00 : f32
    %14 = vector.broadcast %cst_11 : f32 to vector<8x1024xf32>
    %15 = arith.maximumf %13, %14 : vector<8x1024xf32>
    %16 = arith.truncf %15 : vector<8x1024xf32> to vector<8x1024xbf16>
    %c0_12 = arith.constant 0 : index
    %c0_13 = arith.constant 0 : index
    %17 = vector.load %arg6[%c0_12, %c0_13] : memref<1024x128xbf16, #tpu.memory_space<vmem>>, vector<1024x128xbf16>
    %cst_14 = arith.constant dense<0.000000e+00> : vector<8x128xf32>
    %18 = tpu.matmul %16, %17, %cst_14 {dimension_numbers = #tpu.dot_dimension_numbers<[1], [0], [0], [1], [0, 0, 1, 1], [], []>} : vector<8x1024xbf16>, vector<1024x128xbf16>, vector<8x128xf32> -> vector<8x128xf32>
    %c0_15 = arith.constant 0 : index
    %c0_16 = arith.constant 0 : index
    %19 = vector.load %arg7[%c0_15, %c0_16] : memref<1x128xf32, #tpu.memory_space<vmem>>, vector<1x128xf32>
    %20 = vector.broadcast %19 : vector<1x128xf32> to vector<8x128xf32>
    %21 = arith.addf %18, %20 : vector<8x128xf32>
    %22 = math.tanh %21 : vector<8x128xf32>
    %c0_17 = arith.constant 0 : index
    %c0_18 = arith.constant 0 : index
    %23 = vector.load %arg8[%c0_17, %c0_18] : memref<1x128xf32, #tpu.memory_space<vmem>>, vector<1x128xf32>
    %24 = vector.broadcast %23 : vector<1x128xf32> to vector<8x128xf32>
    %25 = arith.mulf %22, %24 : vector<8x128xf32>
    %c0_19 = arith.constant 0 : index
    %c0_20 = arith.constant 0 : index
    %26 = vector.load %arg9[%c0_19, %c0_20] : memref<1x128xf32, #tpu.memory_space<vmem>>, vector<1x128xf32>
    %27 = vector.broadcast %26 : vector<1x128xf32> to vector<8x128xf32>
    %28 = arith.addf %25, %27 : vector<8x128xf32>
    %c0_21 = arith.constant 0 : index
    %c0_22 = arith.constant 0 : index
    %29 = vector.load %arg10[%c0_21, %c0_22] : memref<8x128xf32, #tpu.memory_space<vmem>>, vector<8x128xf32>
    tpu.vector_store %arg10[%c0_21, %c0_22], %28 {strides = array<i32>} : memref<8x128xf32, #tpu.memory_space<vmem>>, vector<8x128xf32>,
    return
  }
  func.func @transform_0(%arg0: i32) -> (i32, i32) {
    %c0_i32 = arith.constant 0 : i32
    %c0_i32_0 = arith.constant 0 : i32
    return %arg0, %c0_i32 : i32, i32
  }
  func.func @transform_1(%arg0: i32) -> (i32, i32) {
    %c0_i32 = arith.constant 0 : i32
    %c0_i32_0 = arith.constant 0 : i32
    %c0_i32_1 = arith.constant 0 : i32
    return %c0_i32, %c0_i32_0 : i32, i32
  }
  func.func @transform_2(%arg0: i32) -> (i32, i32) {
    %c0_i32 = arith.constant 0 : i32
    %c0_i32_0 = arith.constant 0 : i32
    %c0_i32_1 = arith.constant 0 : i32
    return %c0_i32, %c0_i32_0 : i32, i32
  }
  func.func @transform_3(%arg0: i32) -> (i32, i32) {
    %c0_i32 = arith.constant 0 : i32
    %c0_i32_0 = arith.constant 0 : i32
    %c0_i32_1 = arith.constant 0 : i32
    return %c0_i32, %c0_i32_0 : i32, i32
  }
  func.func @transform_4(%arg0: i32) -> (i32, i32) {
    %c0_i32 = arith.constant 0 : i32
    %c0_i32_0 = arith.constant 0 : i32
    %c0_i32_1 = arith.constant 0 : i32
    return %c0_i32, %c0_i32_0 : i32, i32
  }
  func.func @transform_5(%arg0: i32) -> (i32, i32) {
    %c0_i32 = arith.constant 0 : i32
    %c0_i32_0 = arith.constant 0 : i32
    %c0_i32_1 = arith.constant 0 : i32
    return %c0_i32, %c0_i32_0 : i32, i32
  }
  func.func @transform_6(%arg0: i32) -> (i32, i32) {
    %c0_i32 = arith.constant 0 : i32
    %c0_i32_0 = arith.constant 0 : i32
    %c0_i32_1 = arith.constant 0 : i32
    return %c0_i32, %c0_i32_0 : i32, i32
  }
  func.func @transform_7(%arg0: i32) -> (i32, i32) {
    %c0_i32 = arith.constant 0 : i32
    %c0_i32_0 = arith.constant 0 : i32
    %c0_i32_1 = arith.constant 0 : i32
    return %c0_i32, %c0_i32_0 : i32, i32
  }
  func.func @transform_8(%arg0: i32) -> (i32, i32) {
    %c0_i32 = arith.constant 0 : i32
    %c0_i32_0 = arith.constant 0 : i32
    %c0_i32_1 = arith.constant 0 : i32
    return %c0_i32, %c0_i32_0 : i32, i32
  }
  func.func @transform_9(%arg0: i32) -> (i32, i32) {
    %c0_i32 = arith.constant 0 : i32
    %c0_i32_0 = arith.constant 0 : i32
    return %arg0, %c0_i32 : i32, i32
  }
}

</mosaic_0001>

<llo_original>
// kernel: tpu_custom_call.1
$region0: #{tpu_custom_call.1}
  #allocation0 [shape = 'u32[]', space=smem, size = 0x4, offset = 0x4, fixed_abs, tag = 'smem constant byte address 0x4 - core index']
  #allocation1 [shape = 'u32[144,128]{1,0:T(1,128)}', space=vmem, size = 0x12000, scoped, tag = 'internal scratch']
  %s0 = inlined_call_operand.hbm [shape: bf16[8,128], index: 0, kind: input, shape index: {}]
  %s1 = inlined_call_operand.hbm [shape: bf16[128,128], index: 1, kind: input, shape index: {}]
  %s2 = inlined_call_operand.vmem [shape: f32[1,128], index: 2, kind: input, shape index: {}]
  %s3 = inlined_call_operand.hbm [shape: bf16[128,1024], index: 3, kind: input, shape index: {}]
  %s4 = inlined_call_operand.vmem [shape: f32[1,1024], index: 4, kind: input, shape index: {}]
  %s5 = inlined_call_operand.hbm [shape: bf16[1024,128], index: 5, kind: input, shape index: {}]
  %s6 = inlined_call_operand.vmem [shape: f32[1,128], index: 6, kind: input, shape index: {}]
  %s7 = inlined_call_operand.vmem [shape: f32[1,128], index: 7, kind: input, shape index: {}]
  %s8 = inlined_call_operand.vmem [shape: f32[1,128], index: 8, kind: input, shape index: {}]
  %s9 = inlined_call_operand.hbm [shape: f32[8,128], index: 9, kind: output, shape index: {}]
  %s10 = sld [smem:[#allocation0]]
  $region62: #{tpu_custom_call.1} parent=0
    _
  %s12 = ssub.s32 1, %s10
  %s13 = scalar_select 0, %s12, %s10
  $region1: #{tpu_custom_call.1} parent=0
    #allocation2 [shape = 'u8[2048]{0}', space=vmem, size = 0x800, scoped, tag = 'input window, operand 0, single buffered']
    #allocation3 [shape = 's32[1]{0}', space=sflag, size = 0x4, scoped, tag = 'scoped memory for tpu_custom_call.1']
    #allocation4 [shape = 's32[1]{0}', space=sflag, size = 0x4, scoped, tag = 'scoped memory for tpu_custom_call.1']
    #allocation5 [shape = 'u8[32768]{0}', space=vmem, size = 0x8000, scoped, tag = 'input window, operand 1, single buffered']
    #allocation6 [shape = 's32[1]{0}', space=sflag, size = 0x4, scoped, tag = 'scoped memory for tpu_custom_call.1']
    #allocation7 [shape = 'u8[262144]{0}', space=vmem, size = 0x40000, scoped, tag = 'input window, operand 3, single buffered']
    #allocation8 [shape = 'u8[262144]{0}', space=vmem, size = 0x40000, scoped, tag = 'input window, operand 5, single buffered']
    #allocation9 [shape = 's32[1]{0}', space=sflag, size = 0x4, scoped, tag = 'scoped memory for tpu_custom_call.1']
    #allocation10 [shape = 'u8[4096]{0}', space=vmem, size = 0x1000, scoped, tag = 'output window, operand 0, single buffered']
    %14 = vsyncpa [#allocation3], 0
    %15 = vsyncpa [#allocation6], 0
    %16 = vsyncpa [#allocation9], 0
    %17 = vsyncpa [#allocation4], 0
    // Predicated region
    $region2: #{tpu_custom_call.1} parent=1 // pred_check
      _
    $region3: #{tpu_custom_call.1} parent=1 // pred_check_branch
      %19 = sbr.rel (0) target = $region5
    $region4: #{tpu_custom_call.1} parent=1 // pred_region
      %s21 = ssub.s32 64, 64
      %22 = vsyncadd [#allocation3], %s21
      %s24 = sshll.u32 [#allocation2], 4
      %s25 = int_to_ptr.vmem [resolvable:$true] %s24
      %27 = dma.hbm_to_vmem [thread:$0]  %s0, 64, %s25, [#allocation3]
    $region5: #{tpu_custom_call.1} parent=1 // pred_fallthru
      _
    // Predicated region
    $region6: #{tpu_custom_call.1} parent=1 // pred_check
      _
    $region7: #{tpu_custom_call.1} parent=1 // pred_check_branch
      %29 = sbr.rel (0) target = $region9
    $region8: #{tpu_custom_call.1} parent=1 // pred_region
      %s31 = ssub.s32 1024, 1024
      %32 = vsyncadd [#allocation6], %s31
      %s33 = sshll.u32 [#allocation5], 4
      %s34 = int_to_ptr.vmem [resolvable:$true] %s33
      %39 = dma.hbm_to_vmem [thread:$0]  %s1, 1024, %s34, [#allocation6], 64, 64, 4
    $region9: #{tpu_custom_call.1} parent=1 // pred_fallthru
      _
    // Predicated region
    $region10: #{tpu_custom_call.1} parent=1 // pred_check
      _
    $region11: #{tpu_custom_call.1} parent=1 // pred_check_branch
      %41 = sbr.rel (0) target = $region13
    $region12: #{tpu_custom_call.1} parent=1 // pred_region
      _
    $region13: #{tpu_custom_call.1} parent=1 // pred_fallthru
      _
    // Predicated region
    $region14: #{tpu_custom_call.1} parent=1 // pred_check
      _
    $region15: #{tpu_custom_call.1} parent=1 // pred_check_branch
      %43 = sbr.rel (0) target = $region17
    $region16: #{tpu_custom_call.1} parent=1 // pred_region
      %s45 = ssub.s32 8192, 8192
      %46 = vsyncadd [#allocation6], %s45
      %s47 = sshll.u32 [#allocation7], 4
      %s48 = int_to_ptr.vmem [resolvable:$true] %s47
      %53 = dma.hbm_to_vmem [thread:$0]  %s3, 8192, %s48, [#allocation6], 512, 512, 32
    $region17: #{tpu_custom_call.1} parent=1 // pred_fallthru
      _
    // Predicated region
    $region18: #{tpu_custom_call.1} parent=1 // pred_check
      _
    $region19: #{tpu_custom_call.1} parent=1 // pred_check_branch
      %55 = sbr.rel (0) target = $region21
    $region20: #{tpu_custom_call.1} parent=1 // pred_region
      _
    $region21: #{tpu_custom_call.1} parent=1 // pred_fallthru
      _
    // Predicated region
    $region22: #{tpu_custom_call.1} parent=1 // pred_check
      _
    $region23: #{tpu_custom_call.1} parent=1 // pred_check_branch
      %57 = sbr.rel (0) target = $region25
    $region24: #{tpu_custom_call.1} parent=1 // pred_region
      %s59 = ssub.s32 8192, 8192
      %60 = vsyncadd [#allocation9], %s59
      %s61 = sshll.u32 [#allocation8], 4
      %s62 = int_to_ptr.vmem [resolvable:$true] %s61
      %67 = dma.hbm_to_vmem [thread:$0]  %s5, 8192, %s62, [#allocation9], 64, 64, 4
    $region25: #{tpu_custom_call.1} parent=1 // pred_fallthru
      _
    // Predicated region
    $region26: #{tpu_custom_call.1} parent=1 // pred_check
      _
    $region27: #{tpu_custom_call.1} parent=1 // pred_check_branch
      %69 = sbr.rel (0) target = $region29
    $region28: #{tpu_custom_call.1} parent=1 // pred_region
      _
    $region29: #{tpu_custom_call.1} parent=1 // pred_fallthru
      _
    // Predicated region
    $region30: #{tpu_custom_call.1} parent=1 // pred_check
      _
    $region31: #{tpu_custom_call.1} parent=1 // pred_check_branch
      %71 = sbr.rel (0) target = $region33
    $region32: #{tpu_custom_call.1} parent=1 // pred_region
      _
    $region33: #{tpu_custom_call.1} parent=1 // pred_fallthru
      _
    // Predicated region
    $region34: #{tpu_custom_call.1} parent=1 // pred_check
      _
    $region35: #{tpu_custom_call.1} parent=1 // pred_check_branch
      %73 = sbr.rel (0) target = $region37
    $region36: #{tpu_custom_call.1} parent=1 // pred_region
      _
    $region37: #{tpu_custom_call.1} parent=1 // pred_fallthru
      _
    // Predicated region
    $region38: #{tpu_custom_call.1} parent=1 // pred_check
      _
    $region39: #{tpu_custom_call.1} parent=1 // pred_check_branch
      %75 = sbr.rel (0) target = $region41
    $region40: #{tpu_custom_call.1} parent=1 // pred_region
      %76 = dma.done [#allocation3], 64
    $region41: #{tpu_custom_call.1} parent=1 // pred_fallthru
      _
    // Predicated region
    $region42: #{tpu_custom_call.1} parent=1 // pred_check
      _
    $region43: #{tpu_custom_call.1} parent=1 // pred_check_branch
      %78 = sbr.rel (0) target = $region45
    $region44: #{tpu_custom_call.1} parent=1 // pred_region
      %79 = dma.done [#allocation6], 1024
    $region45: #{tpu_custom_call.1} parent=1 // pred_fallthru
      _
    // Predicated region
    $region46: #{tpu_custom_call.1} parent=1 // pred_check
      _
    $region47: #{tpu_custom_call.1} parent=1 // pred_check_branch
      %81 = sbr.rel (0) target = $region49
    $region48: #{tpu_custom_call.1} parent=1 // pred_region
      %82 = dma.done [#allocation6], 8192
    $region49: #{tpu_custom_call.1} parent=1 // pred_fallthru
      _
    // Predicated region
    $region50: #{tpu_custom_call.1} parent=1 // pred_check
      _
    $region51: #{tpu_custom_call.1} parent=1 // pred_check_branch
      %84 = sbr.rel (0) target = $region53
    $region52: #{tpu_custom_call.1} parent=1 // pred_region
      %85 = dma.done [#allocation9], 8192
    $region53: #{tpu_custom_call.1} parent=1 // pred_fallthru
      _
    %v87 = vld [vmem:[#allocation2] sm:$0xf]
    %v88 = vld [vmem:[#allocation5] sm:$0xf]
    %v89 = vld [vmem:[#allocation5 + $0x4] sm:$0xf]
    %v90 = vld [vmem:[#allocation5 + $0x8] sm:$0xf]
    %v91 = vld [vmem:[#allocation5 + $0xc] sm:$0xf]
    %v92 = vld [vmem:[#allocation5 + $0x10] sm:$0xf]
    %v93 = vld [vmem:[#allocation5 + $0x14] sm:$0xf]
    %v94 = vld [vmem:[#allocation5 + $0x18] sm:$0xf]
    %v95 = vld [vmem:[#allocation5 + $0x1c] sm:$0xf]
    %v96 = vld [vmem:[#allocation5 + $0x20] sm:$0xf]
    %v97 = vld [vmem:[#allocation5 + $0x24] sm:$0xf]
    %v98 = vld [vmem:[#allocation5 + $0x28] sm:$0xf]
    %v99 = vld [vmem:[#allocation5 + $0x2c] sm:$0xf]
    %v100 = vld [vmem:[#allocation5 + $0x30] sm:$0xf]
    %v101 = vld [vmem:[#allocation5 + $0x34] sm:$0xf]
    %v102 = vld [vmem:[#allocation5 + $0x38] sm:$0xf]
    %v103 = vld [vmem:[#allocation5 + $0x3c] sm:$0xf]
    %v104 = vld [vmem:[%s2] sm:$0x1]
    %v106 = vlaneseq
    %v107 = vshrl.u32 %v106, 7
    %v108 = vsub.s32 0, %v107
    %v109 = vrot.slane %v104, %v108
    %v127 = vunpack.c.l.b16 %v88
    %v128 = vunpack.c.l.b16 %v89
    %v129 = vunpack.c.l.b16 %v90
    %v130 = vunpack.c.l.b16 %v91
    %v131 = vunpack.c.l.b16 %v92
    %v132 = vunpack.c.l.b16 %v93
    %v133 = vunpack.c.l.b16 %v94
    %v134 = vunpack.c.l.b16 %v95
    %v135 = vunpack.c.l.b16 %v96
    %v136 = vunpack.c.l.b16 %v97
    %v137 = vunpack.c.l.b16 %v98
    %v138 = vunpack.c.l.b16 %v99
    %v139 = vunpack.c.l.b16 %v100
    %v140 = vunpack.c.l.b16 %v101
    %v141 = vunpack.c.l.b16 %v102
    %v142 = vunpack.c.l.b16 %v103
    %v143 = vpack.c.b16 %v128, %v127
    %v144 = vpack.c.b16 %v130, %v129
    %v145 = vpack.c.b16 %v132, %v131
    %v146 = vpack.c.b16 %v134, %v133
    %v147 = vpack.c.b16 %v136, %v135
    %v148 = vpack.c.b16 %v138, %v137
    %v149 = vpack.c.b16 %v140, %v139
    %v150 = vpack.c.b16 %v142, %v141
    %159 = vmatprep.subr.bf16.mxu0 0
    %160 = vmatpush1.bf16.msra.mxu0 %v143
    %161 = vmatprep.subr.bf16.mxu0 0
    %162 = vmatpush1.bf16.msra.mxu0 %v144
    %163 = vmatprep.subr.bf16.mxu0 0
    %164 = vmatpush1.bf16.msra.mxu0 %v145
    %165 = vmatprep.subr.bf16.mxu0 0
    %166 = vmatpush1.bf16.msra.mxu0 %v146
    %167 = vmatprep.subr.bf16.mxu0 0
    %168 = vmatpush1.bf16.msra.mxu0 %v147
    %169 = vmatprep.subr.bf16.mxu0 0
    %170 = vmatpush1.bf16.msra.mxu0 %v148
    %171 = vmatprep.subr.bf16.mxu0 0
    %172 = vmatpush1.bf16.msra.mxu0 %v149
    %173 = vmatprep.subr.bf16.mxu0 0
    %174 = vmatpush1.bf16.msra.mxu0 %v150
    %175 = vmatprep.subr.bf16.mxu0 0
    %176 = vmatpush1.bf16.msra.mxu0 0
    %177 = vmatprep.subr.bf16.mxu0 0
    %178 = vmatpush1.bf16.msra.mxu0 0
    %179 = vmatprep.subr.bf16.mxu0 0
    %180 = vmatpush1.bf16.msra.mxu0 0
    %181 = vmatprep.subr.bf16.mxu0 0
    %182 = vmatpush1.bf16.msra.mxu0 0
    %183 = vmatprep.subr.bf16.mxu0 0
    %184 = vmatpush1.bf16.msra.mxu0 0
    %185 = vmatprep.subr.bf16.mxu0 0
    %186 = vmatpush1.bf16.msra.mxu0 0
    %187 = vmatprep.subr.bf16.mxu0 0
    %188 = vmatpush1.bf16.msra.mxu0 0
    %189 = vmatprep.subr.bf16.mxu0 0
    %190 = vmatpush1.bf16.msra.mxu0 0
    %191 = vmatprep.mubr.bf16.mxu0 0
    %192 = vmatmul.mubr.bf16.gmra.mrb[0].mxu0 %v87
    %v193 = vpop.f32.mrb[0].mxu0
    %v194 = vadd.f32 %v109, %v193
    %v195 = vpop.f32.mrb[0].mxu0
    %v196 = vpop.f32.mrb[0].mxu0
    %v197 = vpop.f32.mrb[0].mxu0
    %198 = vdwg.mxu0
    %v199 = vmax.f32 %v194, 0.0
    %v200 = vpack.c.bf16 %v199, %v199
    %v201 = vld [vmem:[#allocation7] sm:$0xff]
    %v202 = vld [vmem:[#allocation7 + $0x8] sm:$0xff]
    %v203 = vld [vmem:[#allocation7 + $0x10] sm:$0xff]
    %v204 = vld [vmem:[#allocation7 + $0x18] sm:$0xff]
    %v205 = vld [vmem:[#allocation7 + $0x20] sm:$0xff]
    %v206 = vld [vmem:[#allocation7 + $0x28] sm:$0xff]
    %v207 = vld [vmem:[#allocation7 + $0x30] sm:$0xff]
    %v208 = vld [vmem:[#allocation7 + $0x38] sm:$0xff]
    %v209 = vld [vmem:[#allocation7 + $0x40] sm:$0xff]
    %v210 = vld [vmem:[#allocation7 + $0x48] sm:$0xff]
    %v211 = vld [vmem:[#allocation7 + $0x50] sm:$0xff]
    %v212 = vld [vmem:[#allocation7 + $0x58] sm:$0xff]
    %v213 = vld [vmem:[#allocation7 + $0x60] sm:$0xff]
    %v214 = vld [vmem:[#allocation7 + $0x68] sm:$0xff]
    %v215 = vld [vmem:[#allocation7 + $0x70] sm:$0xff]
    %v216 = vld [vmem:[#allocation7 + $0x78] sm:$0xff]
    %v217 = vld [vmem:[#allocation7 + $0x80] sm:$0xff]
    %v218 = vld [vmem:[#allocation7 + $0x88] sm:$0xff]
    %v219 = vld [vmem:[#allocation7 + $0x90] sm:$0xff]
    %v220 = vld [vmem:[#allocation7 + $0x98] sm:$0xff]
    %v221 = vld [vmem:[#allocation7 + $0xa0] sm:$0xff]
    %v222 = vld [vmem:[#allocation7 + $0xa8] sm:$0xff]
    %v223 = vld [vmem:[#allocation7 + $0xb0] sm:$0xff]
    %v224 = vld [vmem:[#allocation7 + $0xb8] sm:$0xff]
    %v225 = vld [vmem:[#allocation7 + $0xc0] sm:$0xff]
    %v226 = vld [vmem:[#allocation7 + $0xc8] sm:$0xff]
    %v227 = vld [vmem:[#allocation7 + $0xd0] sm:$0xff]
    %v228 = vld [vmem:[#allocation7 + $0xd8] sm:$0xff]
    %v229 = vld [vmem:[#allocation7 + $0xe0] sm:$0xff]
    %v230 = vld [vmem:[#allocation7 + $0xe8] sm:$0xff]
    %v231 = vld [vmem:[#allocation7 + $0xf0] sm:$0xff]
    %v232 = vld [vmem:[#allocation7 + $0xf8] sm:$0xff]
    %v233 = vld [vmem:[#allocation7 + $0x100] sm:$0xff]
    %v234 = vld [vmem:[#allocation7 + $0x108] sm:$0xff]
    %v235 = vld [vmem:[#allocation7 + $0x110] sm:$0xff]
    %v236 = vld [vmem:[#allocation7 + $0x118] sm:$0xff]
    %v237 = vld [vmem:[#allocation7 + $0x120] sm:$0xff]
    %v238 = vld [vmem:[#allocation7 + $0x128] sm:$0xff]
    %v239 = vld [vmem:[#allocation7 + $0x130] sm:$0xff]
    %v240 = vld [vmem:[#allocation7 + $0x138] sm:$0xff]
    %v241 = vld [vmem:[#allocation7 + $0x140] sm:$0xff]
    %v242 = vld [vmem:[#allocation7 + $0x148] sm:$0xff]
    %v243 = vld [vmem:[#allocation7 + $0x150] sm:$0xff]
    %v244 = vld [vmem:[#allocation7 + $0x158] sm:$0xff]
    %v245 = vld [vmem:[#allocation7 + $0x160] sm:$0xff]
    %v246 = vld [vmem:[#allocation7 + $0x168] sm:$0xff]
    %v247 = vld [vmem:[#allocation7 + $0x170] sm:$0xff]
    %v248 = vld [vmem:[#allocation7 + $0x178] sm:$0xff]
    %v249 = vld [vmem:[#allocation7 + $0x180] sm:$0xff]
    %v250 = vld [vmem:[#allocation7 + $0x188] sm:$0xff]
    %v251 = vld [vmem:[#allocation7 + $0x190] sm:$0xff]
    %v252 = vld [vmem:[#allocation7 + $0x198] sm:$0xff]
    %v253 = vld [vmem:[#allocation7 + $0x1a0] sm:$0xff]
    %v254 = vld [vmem:[#allocation7 + $0x1a8] sm:$0xff]
    %v255 = vld [vmem:[#allocation7 + $0x1b0] sm:$0xff]
    %v256 = vld [vmem:[#allocation7 + $0x1b8] sm:$0xff]
    %v257 = vld [vmem:[#allocation7 + $0x1c0] sm:$0xff]
    %v258 = vld [vmem:[#allocation7 + $0x1c8] sm:$0xff]
    %v259 = vld [vmem:[#allocation7 + $0x1d0] sm:$0xff]
    %v260 = vld [vmem:[#allocation7 + $0x1d8] sm:$0xff]
    %v261 = vld [vmem:[#allocation7 + $0x1e0] sm:$0xff]
    %v262 = vld [vmem:[#allocation7 + $0x1e8] sm:$0xff]
    %v263 = vld [vmem:[#allocation7 + $0x1f0] sm:$0xff]
    %v264 = vld [vmem:[#allocation7 + $0x1f8] sm:$0xff]
    %v265 = vld [vmem:[%s4] sm:$0xff]
    %v267 = vlaneseq
    %v268 = vshrl.u32 %v267, 7
    %v269 = vsub.s32 0, %v268
    %v270 = vrot.slane %v265, %v269
    %v271 = vlaneseq
    %v272 = vshrl.u32 %v271, 7
    %v273 = vsub.s32 1, %v272
    %v274 = vrot.slane %v265, %v273
    %v275 = vlaneseq
    %v276 = vshrl.u32 %v275, 7
    %v277 = vsub.s32 2, %v276
    %v278 = vrot.slane %v265, %v277
    %v279 = vlaneseq
    %v280 = vshrl.u32 %v279, 7
    %v281 = vsub.s32 3, %v280
    %v282 = vrot.slane %v265, %v281
    %v283 = vlaneseq
    %v284 = vshrl.u32 %v283, 7
    %v285 = vsub.s32 4, %v284
    %v286 = vrot.slane %v265, %v285
    %v287 = vlaneseq
    %v288 = vshrl.u32 %v287, 7
    %v289 = vsub.s32 5, %v288
    %v290 = vrot.slane %v265, %v289
    %v291 = vlaneseq
    %v292 = vshrl.u32 %v291, 7
    %v293 = vsub.s32 6, %v292
    %v294 = vrot.slane %v265, %v293
    %v295 = vlaneseq
    %v296 = vshrl.u32 %v295, 7
    %v297 = vsub.s32 7, %v296
    %v298 = vrot.slane %v265, %v297
    %v371 = vunpack.c.l.b16 %v201
    %v372 = vunpack.c.h.b16 %v201
    %v373 = vunpack.c.l.b16 %v202
    %v374 = vunpack.c.h.b16 %v202
    %v375 = vunpack.c.l.b16 %v203
    %v376 = vunpack.c.h.b16 %v203
    %v377 = vunpack.c.l.b16 %v204
    %v378 = vunpack.c.h.b16 %v204
    %v379 = vunpack.c.l.b16 %v205
    %v380 = vunpack.c.h.b16 %v205
    %v381 = vunpack.c.l.b16 %v206
    %v382 = vunpack.c.h.b16 %v206
    %v383 = vunpack.c.l.b16 %v207
    %v384 = vunpack.c.h.b16 %v207
    %v385 = vunpack.c.l.b16 %v208
    %v386 = vunpack.c.h.b16 %v208
    %v387 = vunpack.c.l.b16 %v209
    %v388 = vunpack.c.h.b16 %v209
    %v389 = vunpack.c.l.b16 %v210
    %v390 = vunpack.c.h.b16 %v210
    %v391 = vunpack.c.l.b16 %v211
    %v392 = vunpack.c.h.b16 %v211
    %v393 = vunpack.c.l.b16 %v212
    %v394 = vunpack.c.h.b16 %v212
    %v395 = vunpack.c.l.b16 %v213
    %v396 = vunpack.c.h.b16 %v213
    %v397 = vunpack.c.l.b16 %v214
    %v398 = vunpack.c.h.b16 %v214
    %v399 = vunpack.c.l.b16 %v215
    %v400 = vunpack.c.h.b16 %v215
    %v401 = vunpack.c.l.b16 %v216
    %v402 = vunpack.c.h.b16 %v216
    %v403 = vunpack.c.l.b16 %v217
    %v404 = vunpack.c.h.b16 %v217
    %v405 = vunpack.c.l.b16 %v218
    %v406 = vunpack.c.h.b16 %v218
    %v407 = vunpack.c.l.b16 %v219
    %v408 = vunpack.c.h.b16 %v219
    %v409 = vunpack.c.l.b16 %v220
    %v410 = vunpack.c.h.b16 %v220
    %v411 = vunpack.c.l.b16 %v221
    %v412 = vunpack.c.h.b16 %v221
    %v413 = vunpack.c.l.b16 %v222
    %v414 = vunpack.c.h.b16 %v222
    %v415 = vunpack.c.l.b16 %v223
    %v416 = vunpack.c.h.b16 %v223
    %v417 = vunpack.c.l.b16 %v224
    %v418 = vunpack.c.h.b16 %v224
    %v419 = vunpack.c.l.b16 %v225
    %v420 = vunpack.c.h.b16 %v225
    %v421 = vunpack.c.l.b16 %v226
    %v422 = vunpack.c.h.b16 %v226
    %v423 = vunpack.c.l.b16 %v227
    %v424 = vunpack.c.h.b16 %v227
    %v425 = vunpack.c.l.b16 %v228
    %v426 = vunpack.c.h.b16 %v228
    %v427 = vunpack.c.l.b16 %v229
    %v428 = vunpack.c.h.b16 %v229
    %v429 = vunpack.c.l.b16 %v230
    %v430 = vunpack.c.h.b16 %v230
    %v431 = vunpack.c.l.b16 %v231
    %v432 = vunpack.c.h.b16 %v231
    %v433 = vunpack.c.l.b16 %v232
    %v434 = vunpack.c.h.b16 %v232
    %v435 = vunpack.c.l.b16 %v233
    %v436 = vunpack.c.h.b16 %v233
    %v437 = vunpack.c.l.b16 %v234
    %v438 = vunpack.c.h.b16 %v234
    %v439 = vunpack.c.l.b16 %v235
    %v440 = vunpack.c.h.b16 %v235
    %v441 = vunpack.c.l.b16 %v236
    %v442 = vunpack.c.h.b16 %v236
    %v443 = vunpack.c.l.b16 %v237
    %v444 = vunpack.c.h.b16 %v237
    %v445 = vunpack.c.l.b16 %v238
    %v446 = vunpack.c.h.b16 %v238
    %v447 = vunpack.c.l.b16 %v239
    %v448 = vunpack.c.h.b16 %v239
    %v449 = vunpack.c.l.b16 %v240
    %v450 = vunpack.c.h.b16 %v240
    %v451 = vunpack.c.l.b16 %v241
    %v452 = vunpack.c.h.b16 %v241
    %v453 = vunpack.c.l.b16 %v242
    %v454 = vunpack.c.h.b16 %v242
    %v455 = vunpack.c.l.b16 %v243
    %v456 = vunpack.c.h.b16 %v243
    %v457 = vunpack.c.l.b16 %v244
    %v458 = vunpack.c.h.b16 %v244
    %v459 = vunpack.c.l.b16 %v245
    %v460 = vunpack.c.h.b16 %v245
    %v461 = vunpack.c.l.b16 %v246
    %v462 = vunpack.c.h.b16 %v246
    %v463 = vunpack.c.l.b16 %v247
    %v464 = vunpack.c.h.b16 %v247
    %v465 = vunpack.c.l.b16 %v248
    %v466 = vunpack.c.h.b16 %v248
    %v467 = vunpack.c.l.b16 %v249
    %v468 = vunpack.c.h.b16 %v249
    %v469 = vunpack.c.l.b16 %v250
    %v470 = vunpack.c.h.b16 %v250
    %v471 = vunpack.c.l.b16 %v251
    %v472 = vunpack.c.h.b16 %v251
    %v473 = vunpack.c.l.b16 %v252
    %v474 = vunpack.c.h.b16 %v252
    %v475 = vunpack.c.l.b16 %v253
    %v476 = vunpack.c.h.b16 %v253
    %v477 = vunpack.c.l.b16 %v254
    %v478 = vunpack.c.h.b16 %v254
    %v479 = vunpack.c.l.b16 %v255
    %v480 = vunpack.c.h.b16 %v255
    %v481 = vunpack.c.l.b16 %v256
    %v482 = vunpack.c.h.b16 %v256
    %v483 = vunpack.c.l.b16 %v257
    %v484 = vunpack.c.h.b16 %v257
    %v485 = vunpack.c.l.b16 %v258
    %v486 = vunpack.c.h.b16 %v258
    %v487 = vunpack.c.l.b16 %v259
    %v488 = vunpack.c.h.b16 %v259
    %v489 = vunpack.c.l.b16 %v260
    %v490 = vunpack.c.h.b16 %v260
    %v491 = vunpack.c.l.b16 %v261
    %v492 = vunpack.c.h.b16 %v261
    %v493 = vunpack.c.l.b16 %v262
    %v494 = vunpack.c.h.b16 %v262
    %v495 = vunpack.c.l.b16 %v263
    %v496 = vunpack.c.h.b16 %v263
    %v497 = vunpack.c.l.b16 %v264
    %v498 = vunpack.c.h.b16 %v264
    %v499 = vpack.c.b16 %v379, %v371
    %v500 = vpack.c.b16 %v380, %v372
    %v501 = vpack.c.b16 %v381, %v373
    %v502 = vpack.c.b16 %v382, %v374
    %v503 = vpack.c.b16 %v383, %v375
    %v504 = vpack.c.b16 %v384, %v376
    %v505 = vpack.c.b16 %v385, %v377
    %v506 = vpack.c.b16 %v386, %v378
    %v507 = vpack.c.b16 %v395, %v387
    %v508 = vpack.c.b16 %v396, %v388
    %v509 = vpack.c.b16 %v397, %v389
    %v510 = vpack.c.b16 %v398, %v390
    %v511 = vpack.c.b16 %v399, %v391
    %v512 = vpack.c.b16 %v400, %v392
    %v513 = vpack.c.b16 %v401, %v393
    %v514 = vpack.c.b16 %v402, %v394
    %v515 = vpack.c.b16 %v411, %v403
    %v516 = vpack.c.b16 %v412, %v404
    %v517 = vpack.c.b16 %v413, %v405
    %v518 = vpack.c.b16 %v414, %v406
    %v519 = vpack.c.b16 %v415, %v407
    %v520 = vpack.c.b16 %v416, %v408
    %v521 = vpack.c.b16 %v417, %v409
    %v522 = vpack.c.b16 %v418, %v410
    %v523 = vpack.c.b16 %v427, %v419
    %v524 = vpack.c.b16 %v428, %v420
    %v525 = vpack.c.b16 %v429, %v421
    %v526 = vpack.c.b16 %v430, %v422
    %v527 = vpack.c.b16 %v431, %v423
    %v528 = vpack.c.b16 %v432, %v424
    %v529 = vpack.c.b16 %v433, %v425
    %v530 = vpack.c.b16 %v434, %v426
    %v531 = vpack.c.b16 %v443, %v435
    %v532 = vpack.c.b16 %v444, %v436
    %v533 = vpack.c.b16 %v445, %v437
    %v534 = vpack.c.b16 %v446, %v438
    %v535 = vpack.c.b16 %v447, %v439
    %v536 = vpack.c.b16 %v448, %v440
    %v537 = vpack.c.b16 %v449, %v441
    %v538 = vpack.c.b16 %v450, %v442
    %v539 = vpack.c.b16 %v459, %v451
    %v540 = vpack.c.b16 %v460, %v452
    %v541 = vpack.c.b16 %v461, %v453
    %v542 = vpack.c.b16 %v462, %v454
    %v543 = vpack.c.b16 %v463, %v455
    %v544 = vpack.c.b16 %v464, %v456
    %v545 = vpack.c.b16 %v465, %v457
    %v546 = vpack.c.b16 %v466, %v458
    %v547 = vpack.c.b16 %v475, %v467
    %v548 = vpack.c.b16 %v476, %v468
    %v549 = vpack.c.b16 %v477, %v469
    %v550 = vpack.c.b16 %v478, %v470
    %v551 = vpack.c.b16 %v479, %v471
    %v552 = vpack.c.b16 %v480, %v472
    %v553 = vpack.c.b16 %v481, %v473
    %v554 = vpack.c.b16 %v482, %v474
    %v555 = vpack.c.b16 %v491, %v483
    %v556 = vpack.c.b16 %v492, %v484
    %v557 = vpack.c.b16 %v493, %v485
    %v558 = vpack.c.b16 %v494, %v486
    %v559 = vpack.c.b16 %v495, %v487
    %v560 = vpack.c.b16 %v496, %v488
    %v561 = vpack.c.b16 %v497, %v489
    %v562 = vpack.c.b16 %v498, %v490
    %627 = vmatprep.subr.bf16.mxu0 %v500
    %628 = vmatpush1.bf16.msra.mxu0 %v499
    %629 = vmatprep.subr.bf16.mxu0 %v508
    %630 = vmatpush1.bf16.msra.mxu0 %v507
    %631 = vmatprep.subr.bf16.mxu0 %v516
    %632 = vmatpush1.bf16.msra.mxu0 %v515
    %633 = vmatprep.subr.bf16.mxu0 %v524
    %634 = vmatpush1.bf16.msra.mxu0 %v523
    %635 = vmatprep.subr.bf16.mxu0 %v532
    %636 = vmatpush1.bf16.msra.mxu0 %v531
    %637 = vmatprep.subr.bf16.mxu0 %v540
    %638 = vmatpush1.bf16.msra.mxu0 %v539
    %639 = vmatprep.subr.bf16.mxu0 %v548
    %640 = vmatpush1.bf16.msra.mxu0 %v547
    %641 = vmatprep.subr.bf16.mxu0 %v556
    %642 = vmatpush1.bf16.msra.mxu0 %v555
    %643 = vmatprep.subr.bf16.mxu0 0
    %644 = vmatpush1.bf16.msra.mxu0 0
    %645 = vmatprep.subr.bf16.mxu0 0
    %646 = vmatpush1.bf16.msra.mxu0 0
    %647 = vmatprep.subr.bf16.mxu0 0
    %648 = vmatpush1.bf16.msra.mxu0 0
    %649 = vmatprep.subr.bf16.mxu0 0
    %650 = vmatpush1.bf16.msra.mxu0 0
    %651 = vmatprep.subr.bf16.mxu0 0
    %652 = vmatpush1.bf16.msra.mxu0 0
    %653 = vmatprep.subr.bf16.mxu0 0
    %654 = vmatpush1.bf16.msra.mxu0 0
    %655 = vmatprep.subr.bf16.mxu0 0
    %656 = vmatpush1.bf16.msra.mxu0 0
    %657 = vmatprep.subr.bf16.mxu0 0
    %658 = vmatpush1.bf16.msra.mxu0 0
    %659 = vmatprep.mubr.bf16.mxu0 0
    %660 = vmatmul.mubr.bf16.gmra.mrb[0].mxu0 %v200
    %v661 = vpop.f32.mrb[0].mxu0
    %v662 = vadd.f32 %v270, %v661
    %v663 = vpop.f32.mrb[0].mxu0
    %v664 = vadd.f32 %v274, %v663
    %v665 = vpop.f32.mrb[0].mxu0
    %v666 = vpop.f32.mrb[0].mxu0
    %667 = vdwg.mxu0
    %668 = vmatprep.subr.bf16.mxu0 %v502
    %669 = vmatpush1.bf16.msra.mxu0 %v501
    %670 = vmatprep.subr.bf16.mxu0 %v510
    %671 = vmatpush1.bf16.msra.mxu0 %v509
    %672 = vmatprep.subr.bf16.mxu0 %v518
    %673 = vmatpush1.bf16.msra.mxu0 %v517
    %674 = vmatprep.subr.bf16.mxu0 %v526
    %675 = vmatpush1.bf16.msra.mxu0 %v525
    %676 = vmatprep.subr.bf16.mxu0 %v534
    %677 = vmatpush1.bf16.msra.mxu0 %v533
    %678 = vmatprep.subr.bf16.mxu0 %v542
    %679 = vmatpush1.bf16.msra.mxu0 %v541
    %680 = vmatprep.subr.bf16.mxu0 %v550
    %681 = vmatpush1.bf16.msra.mxu0 %v549
    %682 = vmatprep.subr.bf16.mxu0 %v558
    %683 = vmatpush1.bf16.msra.mxu0 %v557
    %684 = vmatprep.subr.bf16.mxu0 0
    %685 = vmatpush1.bf16.msra.mxu0 0
    %686 = vmatprep.subr.bf16.mxu0 0
    %687 = vmatpush1.bf16.msra.mxu0 0
    %688 = vmatprep.subr.bf16.mxu0 0
    %689 = vmatpush1.bf16.msra.mxu0 0
    %690 = vmatprep.subr.bf16.mxu0 0
    %691 = vmatpush1.bf16.msra.mxu0 0
    %692 = vmatprep.subr.bf16.mxu0 0
    %693 = vmatpush1.bf16.msra.mxu0 0
    %694 = vmatprep.subr.bf16.mxu0 0
    %695 = vmatpush1.bf16.msra.mxu0 0
    %696 = vmatprep.subr.bf16.mxu0 0
    %697 = vmatpush1.bf16.msra.mxu0 0
    %698 = vmatprep.subr.bf16.mxu0 0
    %699 = vmatpush1.bf16.msra.mxu0 0
    %700 = vmatprep.mubr.bf16.mxu0 0
    %701 = vmatmul.mubr.bf16.gmra.mrb[0].mxu0 %v200
    %v702 = vpop.f32.mrb[0].mxu0
    %v703 = vadd.f32 %v278, %v702
    %v704 = vpop.f32.mrb[0].mxu0
    %v705 = vadd.f32 %v282, %v704
    %v706 = vpop.f32.mrb[0].mxu0
    %v707 = vpop.f32.mrb[0].mxu0
    %708 = vdwg.mxu0
    %709 = vmatprep.subr.bf16.mxu0 %v504
    %710 = vmatpush1.bf16.msra.mxu0 %v503
    %711 = vmatprep.subr.bf16.mxu0 %v512
    %712 = vmatpush1.bf16.msra.mxu0 %v511
    %713 = vmatprep.subr.bf16.mxu0 %v520
    %714 = vmatpush1.bf16.msra.mxu0 %v519
    %715 = vmatprep.subr.bf16.mxu0 %v528
    %716 = vmatpush1.bf16.msra.mxu0 %v527
    %717 = vmatprep.subr.bf16.mxu0 %v536
    %718 = vmatpush1.bf16.msra.mxu0 %v535
    %719 = vmatprep.subr.bf16.mxu0 %v544
    %720 = vmatpush1.bf16.msra.mxu0 %v543
    %721 = vmatprep.subr.bf16.mxu0 %v552
    %722 = vmatpush1.bf16.msra.mxu0 %v551
    %723 = vmatprep.subr.bf16.mxu0 %v560
    %724 = vmatpush1.bf16.msra.mxu0 %v559
    %725 = vmatprep.subr.bf16.mxu0 0
    %726 = vmatpush1.bf16.msra.mxu0 0
    %727 = vmatprep.subr.bf16.mxu0 0
    %728 = vmatpush1.bf16.msra.mxu0 0
    %729 = vmatprep.subr.bf16.mxu0 0
    %730 = vmatpush1.bf16.msra.mxu0 0
    %731 = vmatprep.subr.bf16.mxu0 0
    %732 = vmatpush1.bf16.msra.mxu0 0
    %733 = vmatprep.subr.bf16.mxu0 0
    %734 = vmatpush1.bf16.msra.mxu0 0
    %735 = vmatprep.subr.bf16.mxu0 0
    %736 = vmatpush1.bf16.msra.mxu0 0
    %737 = vmatprep.subr.bf16.mxu0 0
    %738 = vmatpush1.bf16.msra.mxu0 0
    %739 = vmatprep.subr.bf16.mxu0 0
    %740 = vmatpush1.bf16.msra.mxu0 0
    %741 = vmatprep.mubr.bf16.mxu0 0
    %742 = vmatmul.mubr.bf16.gmra.mrb[0].mxu0 %v200
    %v743 = vpop.f32.mrb[0].mxu0
    %v744 = vadd.f32 %v286, %v743
    %v745 = vpop.f32.mrb[0].mxu0
    %v746 = vadd.f32 %v290, %v745
    %v747 = vpop.f32.mrb[0].mxu0
    %v748 = vpop.f32.mrb[0].mxu0
    %749 = vdwg.mxu0
    %750 = vmatprep.subr.bf16.mxu0 %v506
    %751 = vmatpush1.bf16.msra.mxu0 %v505
    %752 = vmatprep.subr.bf16.mxu0 %v514
    %753 = vmatpush1.bf16.msra.mxu0 %v513
    %754 = vmatprep.subr.bf16.mxu0 %v522
    %755 = vmatpush1.bf16.msra.mxu0 %v521
    %756 = vmatprep.subr.bf16.mxu0 %v530
    %757 = vmatpush1.bf16.msra.mxu0 %v529
    %758 = vmatprep.subr.bf16.mxu0 %v538
    %759 = vmatpush1.bf16.msra.mxu0 %v537
    %760 = vmatprep.subr.bf16.mxu0 %v546
    %761 = vmatpush1.bf16.msra.mxu0 %v545
    %762 = vmatprep.subr.bf16.mxu0 %v554
    %763 = vmatpush1.bf16.msra.mxu0 %v553
    %764 = vmatprep.subr.bf16.mxu0 %v562
    %765 = vmatpush1.bf16.msra.mxu0 %v561
    %766 = vmatprep.subr.bf16.mxu0 0
    %767 = vmatpush1.bf16.msra.mxu0 0
    %768 = vmatprep.subr.bf16.mxu0 0
    %769 = vmatpush1.bf16.msra.mxu0 0
    %770 = vmatprep.subr.bf16.mxu0 0
    %771 = vmatpush1.bf16.msra.mxu0 0
    %772 = vmatprep.subr.bf16.mxu0 0
    %773 = vmatpush1.bf16.msra.mxu0 0
    %774 = vmatprep.subr.bf16.mxu0 0
    %775 = vmatpush1.bf16.msra.mxu0 0
    %776 = vmatprep.subr.bf16.mxu0 0
    %777 = vmatpush1.bf16.msra.mxu0 0
    %778 = vmatprep.subr.bf16.mxu0 0
    %779 = vmatpush1.bf16.msra.mxu0 0
    %780 = vmatprep.subr.bf16.mxu0 0
    %781 = vmatpush1.bf16.msra.mxu0 0
    %782 = vmatprep.mubr.bf16.mxu0 0
    %783 = vmatmul.mubr.bf16.gmra.mrb[0].mxu0 %v200
    %v784 = vpop.f32.mrb[0].mxu0
    %v785 = vadd.f32 %v294, %v784
    %v786 = vpop.f32.mrb[0].mxu0
    %v787 = vadd.f32 %v298, %v786
    %v788 = vpop.f32.mrb[0].mxu0
    %v789 = vpop.f32.mrb[0].mxu0
    %790 = vdwg.mxu0
    %v791 = vmax.f32 %v662, 0.0
    %v792 = vmax.f32 %v664, 0.0
    %v793 = vmax.f32 %v703, 0.0
    %v794 = vmax.f32 %v705, 0.0
    %v795 = vmax.f32 %v744, 0.0
    %v796 = vmax.f32 %v746, 0.0
    %v797 = vmax.f32 %v785, 0.0
    %v798 = vmax.f32 %v787, 0.0
    %v799 = vpack.c.bf16 %v791, %v791
    %v800 = vpack.c.bf16 %v792, %v792
    %v801 = vpack.c.bf16 %v793, %v793
    %v802 = vpack.c.bf16 %v794, %v794
    %v803 = vpack.c.bf16 %v795, %v795
    %v804 = vpack.c.bf16 %v796, %v796
    %v805 = vpack.c.bf16 %v797, %v797
    %v806 = vpack.c.bf16 %v798, %v798
    %v807 = vld [vmem:[#allocation8] sm:$0xf]
    %v808 = vld [vmem:[#allocation8 + $0x4] sm:$0xf]
    %v809 = vld [vmem:[#allocation8 + $0x8] sm:$0xf]
    %v810 = vld [vmem:[#allocation8 + $0xc] sm:$0xf]
    %v811 = vld [vmem:[#allocation8 + $0x10] sm:$0xf]
    %v812 = vld [vmem:[#allocation8 + $0x14] sm:$0xf]
    %v813 = vld [vmem:[#allocation8 + $0x18] sm:$0xf]
    %v814 = vld [vmem:[#allocation8 + $0x1c] sm:$0xf]
    %v815 = vld [vmem:[#allocation8 + $0x20] sm:$0xf]
    %v816 = vld [vmem:[#allocation8 + $0x24] sm:$0xf]
    %v817 = vld [vmem:[#allocation8 + $0x28] sm:$0xf]
    %v818 = vld [vmem:[#allocation8 + $0x2c] sm:$0xf]
    %v819 = vld [vmem:[#allocation8 + $0x30] sm:$0xf]
    %v820 = vld [vmem:[#allocation8 + $0x34] sm:$0xf]
    %v821 = vld [vmem:[#allocation8 + $0x38] sm:$0xf]
    %v822 = vld [vmem:[#allocation8 + $0x3c] sm:$0xf]
    %v823 = vld [vmem:[#allocation8 + $0x40] sm:$0xf]
    %v824 = vld [vmem:[#allocation8 + $0x44] sm:$0xf]
    %v825 = vld [vmem:[#allocation8 + $0x48] sm:$0xf]
    %v826 = vld [vmem:[#allocation8 + $0x4c] sm:$0xf]
    %v827 = vld [vmem:[#allocation8 + $0x50] sm:$0xf]
    %v828 = vld [vmem:[#allocation8 + $0x54] sm:$0xf]
    %v829 = vld [vmem:[#allocation8 + $0x58] sm:$0xf]
    %v830 = vld [vmem:[#allocation8 + $0x5c] sm:$0xf]
    %v831 = vld [vmem:[#allocation8 + $0x60] sm:$0xf]
    %v832 = vld [vmem:[#allocation8 + $0x64] sm:$0xf]
    %v833 = vld [vmem:[#allocation8 + $0x68] sm:$0xf]
    %v834 = vld [vmem:[#allocation8 + $0x6c] sm:$0xf]
    %v835 = vld [vmem:[#allocation8 + $0x70] sm:$0xf]
    %v836 = vld [vmem:[#allocation8 + $0x74] sm:$0xf]
    %v837 = vld [vmem:[#allocation8 + $0x78] sm:$0xf]
    %v838 = vld [vmem:[#allocation8 + $0x7c] sm:$0xf]
    %v839 = vld [vmem:[#allocation8 + $0x80] sm:$0xf]
    %v840 = vld [vmem:[#allocation8 + $0x84] sm:$0xf]
    %v841 = vld [vmem:[#allocation8 + $0x88] sm:$0xf]
    %v842 = vld [vmem:[#allocation8 + $0x8c] sm:$0xf]
    %v843 = vld [vmem:[#allocation8 + $0x90] sm:$0xf]
    %v844 = vld [vmem:[#allocation8 + $0x94] sm:$0xf]
    %v845 = vld [vmem:[#allocation8 + $0x98] sm:$0xf]
    %v846 = vld [vmem:[#allocation8 + $0x9c] sm:$0xf]
    %v847 = vld [vmem:[#allocation8 + $0xa0] sm:$0xf]
    %v848 = vld [vmem:[#allocation8 + $0xa4] sm:$0xf]
    %v849 = vld [vmem:[#allocation8 + $0xa8] sm:$0xf]
    %v850 = vld [vmem:[#allocation8 + $0xac] sm:$0xf]
    %v851 = vld [vmem:[#allocation8 + $0xb0] sm:$0xf]
    %v852 = vld [vmem:[#allocation8 + $0xb4] sm:$0xf]
    %v853 = vld [vmem:[#allocation8 + $0xb8] sm:$0xf]
    %v854 = vld [vmem:[#allocation8 + $0xbc] sm:$0xf]
    %v855 = vld [vmem:[#allocation8 + $0xc0] sm:$0xf]
    %v856 = vld [vmem:[#allocation8 + $0xc4] sm:$0xf]
    %v857 = vld [vmem:[#allocation8 + $0xc8] sm:$0xf]
    %v858 = vld [vmem:[#allocation8 + $0xcc] sm:$0xf]
    %v859 = vld [vmem:[#allocation8 + $0xd0] sm:$0xf]
    %v860 = vld [vmem:[#allocation8 + $0xd4] sm:$0xf]
    %v861 = vld [vmem:[#allocation8 + $0xd8] sm:$0xf]
    %v862 = vld [vmem:[#allocation8 + $0xdc] sm:$0xf]
    %v863 = vld [vmem:[#allocation8 + $0xe0] sm:$0xf]
    %v864 = vld [vmem:[#allocation8 + $0xe4] sm:$0xf]
    %v865 = vld [vmem:[#allocation8 + $0xe8] sm:$0xf]
    %v866 = vld [vmem:[#allocation8 + $0xec] sm:$0xf]
    %v867 = vld [vmem:[#allocation8 + $0xf0] sm:$0xf]
    %v868 = vld [vmem:[#allocation8 + $0xf4] sm:$0xf]
    %v869 = vld [vmem:[#allocation8 + $0xf8] sm:$0xf]
    %v870 = vld [vmem:[#allocation8 + $0xfc] sm:$0xf]
    %v871 = vld [vmem:[#allocation8 + $0x100] sm:$0xf]
    %v872 = vld [vmem:[#allocation8 + $0x104] sm:$0xf]
    %v873 = vld [vmem:[#allocation8 + $0x108] sm:$0xf]
    %v874 = vld [vmem:[#allocation8 + $0x10c] sm:$0xf]
    %v875 = vld [vmem:[#allocation8 + $0x110] sm:$0xf]
    %v876 = vld [vmem:[#allocation8 + $0x114] sm:$0xf]
    %v877 = vld [vmem:[#allocation8 + $0x118] sm:$0xf]
    %v878 = vld [vmem:[#allocation8 + $0x11c] sm:$0xf]
    %v879 = vld [vmem:[#allocation8 + $0x120] sm:$0xf]
    %v880 = vld [vmem:[#allocation8 + $0x124] sm:$0xf]
    %v881 = vld [vmem:[#allocation8 + $0x128] sm:$0xf]
    %v882 = vld [vmem:[#allocation8 + $0x12c] sm:$0xf]
    %v883 = vld [vmem:[#allocation8 + $0x130] sm:$0xf]
    %v884 = vld [vmem:[#allocation8 + $0x134] sm:$0xf]
    %v885 = vld [vmem:[#allocation8 + $0x138] sm:$0xf]
    %v886 = vld [vmem:[#allocation8 + $0x13c] sm:$0xf]
    %v887 = vld [vmem:[#allocation8 + $0x140] sm:$0xf]
    %v888 = vld [vmem:[#allocation8 + $0x144] sm:$0xf]
    %v889 = vld [vmem:[#allocation8 + $0x148] sm:$0xf]
    %v890 = vld [vmem:[#allocation8 + $0x14c] sm:$0xf]
    %v891 = vld [vmem:[#allocation8 + $0x150] sm:$0xf]
    %v892 = vld [vmem:[#allocation8 + $0x154] sm:$0xf]
    %v893 = vld [vmem:[#allocation8 + $0x158] sm:$0xf]
    %v894 = vld [vmem:[#allocation8 + $0x15c] sm:$0xf]
    %v895 = vld [vmem:[#allocation8 + $0x160] sm:$0xf]
    %v896 = vld [vmem:[#allocation8 + $0x164] sm:$0xf]
    %v897 = vld [vmem:[#allocation8 + $0x168] sm:$0xf]
    %v898 = vld [vmem:[#allocation8 + $0x16c] sm:$0xf]
    %v899 = vld [vmem:[#allocation8 + $0x170] sm:$0xf]
    %v900 = vld [vmem:[#allocation8 + $0x174] sm:$0xf]
    %v901 = vld [vmem:[#allocation8 + $0x178] sm:$0xf]
    %v902 = vld [vmem:[#allocation8 + $0x17c] sm:$0xf]
    %v903 = vld [vmem:[#allocation8 + $0x180] sm:$0xf]
    %v904 = vld [vmem:[#allocation8 + $0x184] sm:$0xf]
    %v905 = vld [vmem:[#allocation8 + $0x188] sm:$0xf]
    %v906 = vld [vmem:[#allocation8 + $0x18c] sm:$0xf]
    %v907 = vld [vmem:[#allocation8 + $0x190] sm:$0xf]
    %v908 = vld [vmem:[#allocation8 + $0x194] sm:$0xf]
    %v909 = vld [vmem:[#allocation8 + $0x198] sm:$0xf]
    %v910 = vld [vmem:[#allocation8 + $0x19c] sm:$0xf]
    %v911 = vld [vmem:[#allocation8 + $0x1a0] sm:$0xf]
    %v912 = vld [vmem:[#allocation8 + $0x1a4] sm:$0xf]
    %v913 = vld [vmem:[#allocation8 + $0x1a8] sm:$0xf]
    %v914 = vld [vmem:[#allocation8 + $0x1ac] sm:$0xf]
    %v915 = vld [vmem:[#allocation8 + $0x1b0] sm:$0xf]
    %v916 = vld [vmem:[#allocation8 + $0x1b4] sm:$0xf]
    %v917 = vld [vmem:[#allocation8 + $0x1b8] sm:$0xf]
    %v918 = vld [vmem:[#allocation8 + $0x1bc] sm:$0xf]
    %v919 = vld [vmem:[#allocation8 + $0x1c0] sm:$0xf]
    %v920 = vld [vmem:[#allocation8 + $0x1c4] sm:$0xf]
    %v921 = vld [vmem:[#allocation8 + $0x1c8] sm:$0xf]
    %v922 = vld [vmem:[#allocation8 + $0x1cc] sm:$0xf]
    %v923 = vld [vmem:[#allocation8 + $0x1d0] sm:$0xf]
    %v924 = vld [vmem:[#allocation8 + $0x1d4] sm:$0xf]
    %v925 = vld [vmem:[#allocation8 + $0x1d8] sm:$0xf]
    %v926 = vld [vmem:[#allocation8 + $0x1dc] sm:$0xf]
    %v927 = vld [vmem:[#allocation8 + $0x1e0] sm:$0xf]
    %v928 = vld [vmem:[#allocation8 + $0x1e4] sm:$0xf]
    %v929 = vld [vmem:[#allocation8 + $0x1e8] sm:$0xf]
    %v930 = vld [vmem:[#allocation8 + $0x1ec] sm:$0xf]
    %v931 = vld [vmem:[#allocation8 + $0x1f0] sm:$0xf]
    %v932 = vld [vmem:[#allocation8 + $0x1f4] sm:$0xf]
    %v933 = vld [vmem:[#allocation8 + $0x1f8] sm:$0xf]
    %v934 = vld [vmem:[#allocation8 + $0x1fc] sm:$0xf]
    %v935 = vld [vmem:[%s6] sm:$0x1]
    %v937 = vlaneseq
    %v938 = vshrl.u32 %v937, 7
    %v939 = vsub.s32 0, %v938
    %v940 = vrot.slane %v935, %v939
    %v1070 = vunpack.c.l.b16 %v807
    %v1071 = vunpack.c.l.b16 %v808
    %v1072 = vunpack.c.l.b16 %v809
    %v1073 = vunpack.c.l.b16 %v810
    %v1074 = vunpack.c.l.b16 %v811
    %v1075 = vunpack.c.l.b16 %v812
    %v1076 = vunpack.c.l.b16 %v813
    %v1077 = vunpack.c.l.b16 %v814
    %v1078 = vunpack.c.l.b16 %v815
    %v1079 = vunpack.c.l.b16 %v816
    %v1080 = vunpack.c.l.b16 %v817
    %v1081 = vunpack.c.l.b16 %v818
    %v1082 = vunpack.c.l.b16 %v819
    %v1083 = vunpack.c.l.b16 %v820
    %v1084 = vunpack.c.l.b16 %v821
    %v1085 = vunpack.c.l.b16 %v822
    %v1086 = vunpack.c.l.b16 %v823
    %v1087 = vunpack.c.l.b16 %v824
    %v1088 = vunpack.c.l.b16 %v825
    %v1089 = vunpack.c.l.b16 %v826
    %v1090 = vunpack.c.l.b16 %v827
    %v1091 = vunpack.c.l.b16 %v828
    %v1092 = vunpack.c.l.b16 %v829
    %v1093 = vunpack.c.l.b16 %v830
    %v1094 = vunpack.c.l.b16 %v831
    %v1095 = vunpack.c.l.b16 %v832
    %v1096 = vunpack.c.l.b16 %v833
    %v1097 = vunpack.c.l.b16 %v834
    %v1098 = vunpack.c.l.b16 %v835
    %v1099 = vunpack.c.l.b16 %v836
    %v1100 = vunpack.c.l.b16 %v837
    %v1101 = vunpack.c.l.b16 %v838
    %v1102 = vunpack.c.l.b16 %v839
    %v1103 = vunpack.c.l.b16 %v840
    %v1104 = vunpack.c.l.b16 %v841
    %v1105 = vunpack.c.l.b16 %v842
    %v1106 = vunpack.c.l.b16 %v843
    %v1107 = vunpack.c.l.b16 %v844
    %v1108 = vunpack.c.l.b16 %v845
    %v1109 = vunpack.c.l.b16 %v846
    %v1110 = vunpack.c.l.b16 %v847
    %v1111 = vunpack.c.l.b16 %v848
    %v1112 = vunpack.c.l.b16 %v849
    %v1113 = vunpack.c.l.b16 %v850
    %v1114 = vunpack.c.l.b16 %v851
    %v1115 = vunpack.c.l.b16 %v852
    %v1116 = vunpack.c.l.b16 %v853
    %v1117 = vunpack.c.l.b16 %v854
    %v1118 = vunpack.c.l.b16 %v855
    %v1119 = vunpack.c.l.b16 %v856
    %v1120 = vunpack.c.l.b16 %v857
    %v1121 = vunpack.c.l.b16 %v858
    %v1122 = vunpack.c.l.b16 %v859
    %v1123 = vunpack.c.l.b16 %v860
    %v1124 = vunpack.c.l.b16 %v861
    %v1125 = vunpack.c.l.b16 %v862
    %v1126 = vunpack.c.l.b16 %v863
    %v1127 = vunpack.c.l.b16 %v864
    %v1128 = vunpack.c.l.b16 %v865
    %v1129 = vunpack.c.l.b16 %v866
    %v1130 = vunpack.c.l.b16 %v867
    %v1131 = vunpack.c.l.b16 %v868
    %v1132 = vunpack.c.l.b16 %v869
    %v1133 = vunpack.c.l.b16 %v870
    %v1134 = vunpack.c.l.b16 %v871
    %v1135 = vunpack.c.l.b16 %v872
    %v1136 = vunpack.c.l.b16 %v873
    %v1137 = vunpack.c.l.b16 %v874
    %v1138 = vunpack.c.l.b16 %v875
    %v1139 = vunpack.c.l.b16 %v876
    %v1140 = vunpack.c.l.b16 %v877
    %v1141 = vunpack.c.l.b16 %v878
    %v1142 = vunpack.c.l.b16 %v879
    %v1143 = vunpack.c.l.b16 %v880
    %v1144 = vunpack.c.l.b16 %v881
    %v1145 = vunpack.c.l.b16 %v882
    %v1146 = vunpack.c.l.b16 %v883
    %v1147 = vunpack.c.l.b16 %v884
    %v1148 = vunpack.c.l.b16 %v885
    %v1149 = vunpack.c.l.b16 %v886
    %v1150 = vunpack.c.l.b16 %v887
    %v1151 = vunpack.c.l.b16 %v888
    %v1152 = vunpack.c.l.b16 %v889
    %v1153 = vunpack.c.l.b16 %v890
    %v1154 = vunpack.c.l.b16 %v891
    %v1155 = vunpack.c.l.b16 %v892
    %v1156 = vunpack.c.l.b16 %v893
    %v1157 = vunpack.c.l.b16 %v894
    %v1158 = vunpack.c.l.b16 %v895
    %v1159 = vunpack.c.l.b16 %v896
    %v1160 = vunpack.c.l.b16 %v897
    %v1161 = vunpack.c.l.b16 %v898
    %v1162 = vunpack.c.l.b16 %v899
    %v1163 = vunpack.c.l.b16 %v900
    %v1164 = vunpack.c.l.b16 %v901
    %v1165 = vunpack.c.l.b16 %v902
    %v1166 = vunpack.c.l.b16 %v903
    %v1167 = vunpack.c.l.b16 %v904
    %v1168 = vunpack.c.l.b16 %v905
    %v1169 = vunpack.c.l.b16 %v906
    %v1170 = vunpack.c.l.b16 %v907
    %v1171 = vunpack.c.l.b16 %v908
    %v1172 = vunpack.c.l.b16 %v909
    %v1173 = vunpack.c.l.b16 %v910
    %v1174 = vunpack.c.l.b16 %v911
    %v1175 = vunpack.c.l.b16 %v912
    %v1176 = vunpack.c.l.b16 %v913
    %v1177 = vunpack.c.l.b16 %v914
    %v1178 = vunpack.c.l.b16 %v915
    %v1179 = vunpack.c.l.b16 %v916
    %v1180 = vunpack.c.l.b16 %v917
    %v1181 = vunpack.c.l.b16 %v918
    %v1182 = vunpack.c.l.b16 %v919
    %v1183 = vunpack.c.l.b16 %v920
    %v1184 = vunpack.c.l.b16 %v921
    %v1185 = vunpack.c.l.b16 %v922
    %v1186 = vunpack.c.l.b16 %v923
    %v1187 = vunpack.c.l.b16 %v924
    %v1188 = vunpack.c.l.b16 %v925
    %v1189 = vunpack.c.l.b16 %v926
    %v1190 = vunpack.c.l.b16 %v927
    %v1191 = vunpack.c.l.b16 %v928
    %v1192 = vunpack.c.l.b16 %v929
    %v1193 = vunpack.c.l.b16 %v930
    %v1194 = vunpack.c.l.b16 %v931
    %v1195 = vunpack.c.l.b16 %v932
    %v1196 = vunpack.c.l.b16 %v933
    %v1197 = vunpack.c.l.b16 %v934
    %v1198 = vpack.c.b16 %v1071, %v1070
    %v1199 = vpack.c.b16 %v1073, %v1072
    %v1200 = vpack.c.b16 %v1075, %v1074
    %v1201 = vpack.c.b16 %v1077, %v1076
    %v1202 = vpack.c.b16 %v1079, %v1078
    %v1203 = vpack.c.b16 %v1081, %v1080
    %v1204 = vpack.c.b16 %v1083, %v1082
    %v1205 = vpack.c.b16 %v1085, %v1084
    %v1206 = vpack.c.b16 %v1087, %v1086
    %v1207 = vpack.c.b16 %v1089, %v1088
    %v1208 = vpack.c.b16 %v1091, %v1090
    %v1209 = vpack.c.b16 %v1093, %v1092
    %v1210 = vpack.c.b16 %v1095, %v1094
    %v1211 = vpack.c.b16 %v1097, %v1096
    %v1212 = vpack.c.b16 %v1099, %v1098
    %v1213 = vpack.c.b16 %v1101, %v1100
    %v1214 = vpack.c.b16 %v1103, %v1102
    %v1215 = vpack.c.b16 %v1105, %v1104
    %v1216 = vpack.c.b16 %v1107, %v1106
    %v1217 = vpack.c.b16 %v1109, %v1108
    %v1218 = vpack.c.b16 %v1111, %v1110
    %v1219 = vpack.c.b16 %v1113, %v1112
    %v1220 = vpack.c.b16 %v1115, %v1114
    %v1221 = vpack.c.b16 %v1117, %v1116
    %v1222 = vpack.c.b16 %v1119, %v1118
    %v1223 = vpack.c.b16 %v1121, %v1120
    %v1224 = vpack.c.b16 %v1123, %v1122
    %v1225 = vpack.c.b16 %v1125, %v1124
    %v1226 = vpack.c.b16 %v1127, %v1126
    %v1227 = vpack.c.b16 %v1129, %v1128
    %v1228 = vpack.c.b16 %v1131, %v1130
    %v1229 = vpack.c.b16 %v1133, %v1132
    %v1230 = vpack.c.b16 %v1135, %v1134
    %v1231 = vpack.c.b16 %v1137, %v1136
    %v1232 = vpack.c.b16 %v1139, %v1138
    %v1233 = vpack.c.b16 %v1141, %v1140
    %v1234 = vpack.c.b16 %v1143, %v1142
    %v1235 = vpack.c.b16 %v1145, %v1144
    %v1236 = vpack.c.b16 %v1147, %v1146
    %v1237 = vpack.c.b16 %v1149, %v1148
    %v1238 = vpack.c.b16 %v1151, %v1150
    %v1239 = vpack.c.b16 %v1153, %v1152
    %v1240 = vpack.c.b16 %v1155, %v1154
    %v1241 = vpack.c.b16 %v1157, %v1156
    %v1242 = vpack.c.b16 %v1159, %v1158
    %v1243 = vpack.c.b16 %v1161, %v1160
    %v1244 = vpack.c.b16 %v1163, %v1162
    %v1245 = vpack.c.b16 %v1165, %v1164
    %v1246 = vpack.c.b16 %v1167, %v1166
    %v1247 = vpack.c.b16 %v1169, %v1168
    %v1248 = vpack.c.b16 %v1171, %v1170
    %v1249 = vpack.c.b16 %v1173, %v1172
    %v1250 = vpack.c.b16 %v1175, %v1174
    %v1251 = vpack.c.b16 %v1177, %v1176
    %v1252 = vpack.c.b16 %v1179, %v1178
    %v1253 = vpack.c.b16 %v1181, %v1180
    %v1254 = vpack.c.b16 %v1183, %v1182
    %v1255 = vpack.c.b16 %v1185, %v1184
    %v1256 = vpack.c.b16 %v1187, %v1186
    %v1257 = vpack.c.b16 %v1189, %v1188
    %v1258 = vpack.c.b16 %v1191, %v1190
    %v1259 = vpack.c.b16 %v1193, %v1192
    %v1260 = vpack.c.b16 %v1195, %v1194
    %v1261 = vpack.c.b16 %v1197, %v1196
    %1326 = vmatprep.subr.bf16.mxu0 0
    %1327 = vmatpush1.bf16.msra.mxu0 %v1198
    %1328 = vmatprep.subr.bf16.mxu0 0
    %1329 = vmatpush1.bf16.msra.mxu0 %v1199
    %1330 = vmatprep.subr.bf16.mxu0 0
    %1331 = vmatpush1.bf16.msra.mxu0 %v1200
    %1332 = vmatprep.subr.bf16.mxu0 0
    %1333 = vmatpush1.bf16.msra.mxu0 %v1201
    %1334 = vmatprep.subr.bf16.mxu0 0
    %1335 = vmatpush1.bf16.msra.mxu0 %v1202
    %1336 = vmatprep.subr.bf16.mxu0 0
    %1337 = vmatpush1.bf16.msra.mxu0 %v1203
    %1338 = vmatprep.subr.bf16.mxu0 0
    %1339 = vmatpush1.bf16.msra.mxu0 %v1204
    %1340 = vmatprep.subr.bf16.mxu0 0
    %1341 = vmatpush1.bf16.msra.mxu0 %v1205
    %1342 = vmatprep.subr.bf16.mxu0 0
    %1343 = vmatpush1.bf16.msra.mxu0 %v1206
    %1344 = vmatprep.subr.bf16.mxu0 0
    %1345 = vmatpush1.bf16.msra.mxu0 %v1207
    %1346 = vmatprep.subr.bf16.mxu0 0
    %1347 = vmatpush1.bf16.msra.mxu0 %v1208
    %1348 = vmatprep.subr.bf16.mxu0 0
    %1349 = vmatpush1.bf16.msra.mxu0 %v1209
    %1350 = vmatprep.subr.bf16.mxu0 0
    %1351 = vmatpush1.bf16.msra.mxu0 %v1210
    %1352 = vmatprep.subr.bf16.mxu0 0
    %1353 = vmatpush1.bf16.msra.mxu0 %v1211
    %1354 = vmatprep.subr.bf16.mxu0 0
    %1355 = vmatpush1.bf16.msra.mxu0 %v1212
    %1356 = vmatprep.subr.bf16.mxu0 0
    %1357 = vmatpush1.bf16.msra.mxu0 %v1213
    %1358 = vmatprep.mubr.bf16.mxu0 %v800
    %1359 = vmatmul.mubr.bf16.gmra.mrb[0].mxu0 %v799
    %v1360 = vpop.f32.mrb[0].mxu0
    %v1361 = vadd.f32 %v940, %v1360
    %v1362 = vpop.f32.mrb[0].mxu0
    %v1363 = vpop.f32.mrb[0].mxu0
    %v1364 = vpop.f32.mrb[0].mxu0
    %1365 = vdwg.mxu0
    %1366 = vmatprep.subr.bf16.mxu0 0
    %1367 = vmatpush1.bf16.msra.mxu0 %v1214
    %1368 = vmatprep.subr.bf16.mxu0 0
    %1369 = vmatpush1.bf16.msra.mxu0 %v1215
    %1370 = vmatprep.subr.bf16.mxu0 0
    %1371 = vmatpush1.bf16.msra.mxu0 %v1216
    %1372 = vmatprep.subr.bf16.mxu0 0
    %1373 = vmatpush1.bf16.msra.mxu0 %v1217
    %1374 = vmatprep.subr.bf16.mxu0 0
    %1375 = vmatpush1.bf16.msra.mxu0 %v1218
    %1376 = vmatprep.subr.bf16.mxu0 0
    %1377 = vmatpush1.bf16.msra.mxu0 %v1219
    %1378 = vmatprep.subr.bf16.mxu0 0
    %1379 = vmatpush1.bf16.msra.mxu0 %v1220
    %1380 = vmatprep.subr.bf16.mxu0 0
    %1381 = vmatpush1.bf16.msra.mxu0 %v1221
    %1382 = vmatprep.subr.bf16.mxu0 0
    %1383 = vmatpush1.bf16.msra.mxu0 %v1222
    %1384 = vmatprep.subr.bf16.mxu0 0
    %1385 = vmatpush1.bf16.msra.mxu0 %v1223
    %1386 = vmatprep.subr.bf16.mxu0 0
    %1387 = vmatpush1.bf16.msra.mxu0 %v1224
    %1388 = vmatprep.subr.bf16.mxu0 0
    %1389 = vmatpush1.bf16.msra.mxu0 %v1225
    %1390 = vmatprep.subr.bf16.mxu0 0
    %1391 = vmatpush1.bf16.msra.mxu0 %v1226
    %1392 = vmatprep.subr.bf16.mxu0 0
    %1393 = vmatpush1.bf16.msra.mxu0 %v1227
    %1394 = vmatprep.subr.bf16.mxu0 0
    %1395 = vmatpush1.bf16.msra.mxu0 %v1228
    %1396 = vmatprep.subr.bf16.mxu0 0
    %1397 = vmatpush1.bf16.msra.mxu0 %v1229
    %1398 = vmatprep.mubr.bf16.mxu0 %v802
    %1399 = vmatmul.mubr.bf16.gmra.mrb[0].mxu0 %v801
    %v1400 = vpop.f32.mrb[0].mxu0
    %v1401 = vadd.f32 %v1361, %v1400
    %v1402 = vpop.f32.mrb[0].mxu0
    %v1403 = vpop.f32.mrb[0].mxu0
    %v1404 = vpop.f32.mrb[0].mxu0
    %1405 = vdwg.mxu0
    %1406 = vmatprep.subr.bf16.mxu0 0
    %1407 = vmatpush1.bf16.msra.mxu0 %v1230
    %1408 = vmatprep.subr.bf16.mxu0 0
    %1409 = vmatpush1.bf16.msra.mxu0 %v1231
    %1410 = vmatprep.subr.bf16.mxu0 0
    %1411 = vmatpush1.bf16.msra.mxu0 %v1232
    %1412 = vmatprep.subr.bf16.mxu0 0
    %1413 = vmatpush1.bf16.msra.mxu0 %v1233
    %1414 = vmatprep.subr.bf16.mxu0 0
    %1415 = vmatpush1.bf16.msra.mxu0 %v1234
    %1416 = vmatprep.subr.bf16.mxu0 0
    %1417 = vmatpush1.bf16.msra.mxu0 %v1235
    %1418 = vmatprep.subr.bf16.mxu0 0
    %1419 = vmatpush1.bf16.msra.mxu0 %v1236
    %1420 = vmatprep.subr.bf16.mxu0 0
    %1421 = vmatpush1.bf16.msra.mxu0 %v1237
    %1422 = vmatprep.subr.bf16.mxu0 0
    %1423 = vmatpush1.bf16.msra.mxu0 %v1238
    %1424 = vmatprep.subr.bf16.mxu0 0
    %1425 = vmatpush1.bf16.msra.mxu0 %v1239
    %1426 = vmatprep.subr.bf16.mxu0 0
    %1427 = vmatpush1.bf16.msra.mxu0 %v1240
    %1428 = vmatprep.subr.bf16.mxu0 0
    %1429 = vmatpush1.bf16.msra.mxu0 %v1241
    %1430 = vmatprep.subr.bf16.mxu0 0
    %1431 = vmatpush1.bf16.msra.mxu0 %v1242
    %1432 = vmatprep.subr.bf16.mxu0 0
    %1433 = vmatpush1.bf16.msra.mxu0 %v1243
    %1434 = vmatprep.subr.bf16.mxu0 0
    %1435 = vmatpush1.bf16.msra.mxu0 %v1244
    %1436 = vmatprep.subr.bf16.mxu0 0
    %1437 = vmatpush1.bf16.msra.mxu0 %v1245
    %1438 = vmatprep.mubr.bf16.mxu0 %v804
    %1439 = vmatmul.mubr.bf16.gmra.mrb[0].mxu0 %v803
    %v1440 = vpop.f32.mrb[0].mxu0
    %v1441 = vadd.f32 %v1401, %v1440
    %v1442 = vpop.f32.mrb[0].mxu0
    %v1443 = vpop.f32.mrb[0].mxu0
    %v1444 = vpop.f32.mrb[0].mxu0
    %1445 = vdwg.mxu0
    %1446 = vmatprep.subr.bf16.mxu0 0
    %1447 = vmatpush1.bf16.msra.mxu0 %v1246
    %1448 = vmatprep.subr.bf16.mxu0 0
    %1449 = vmatpush1.bf16.msra.mxu0 %v1247
    %1450 = vmatprep.subr.bf16.mxu0 0
    %1451 = vmatpush1.bf16.msra.mxu0 %v1248
    %1452 = vmatprep.subr.bf16.mxu0 0
    %1453 = vmatpush1.bf16.msra.mxu0 %v1249
    %1454 = vmatprep.subr.bf16.mxu0 0
    %1455 = vmatpush1.bf16.msra.mxu0 %v1250
    %1456 = vmatprep.subr.bf16.mxu0 0
    %1457 = vmatpush1.bf16.msra.mxu0 %v1251
    %1458 = vmatprep.subr.bf16.mxu0 0
    %1459 = vmatpush1.bf16.msra.mxu0 %v1252
    %1460 = vmatprep.subr.bf16.mxu0 0
    %1461 = vmatpush1.bf16.msra.mxu0 %v1253
    %1462 = vmatprep.subr.bf16.mxu0 0
    %1463 = vmatpush1.bf16.msra.mxu0 %v1254
    %1464 = vmatprep.subr.bf16.mxu0 0
    %1465 = vmatpush1.bf16.msra.mxu0 %v1255
    %1466 = vmatprep.subr.bf16.mxu0 0
    %1467 = vmatpush1.bf16.msra.mxu0 %v1256
    %1468 = vmatprep.subr.bf16.mxu0 0
    %1469 = vmatpush1.bf16.msra.mxu0 %v1257
    %1470 = vmatprep.subr.bf16.mxu0 0
    %1471 = vmatpush1.bf16.msra.mxu0 %v1258
    %1472 = vmatprep.subr.bf16.mxu0 0
    %1473 = vmatpush1.bf16.msra.mxu0 %v1259
    %1474 = vmatprep.subr.bf16.mxu0 0
    %1475 = vmatpush1.bf16.msra.mxu0 %v1260
    %1476 = vmatprep.subr.bf16.mxu0 0
    %1477 = vmatpush1.bf16.msra.mxu0 %v1261
    %1478 = vmatprep.mubr.bf16.mxu0 %v806
    %1479 = vmatmul.mubr.bf16.gmra.mrb[0].mxu0 %v805
    %v1480 = vpop.f32.mrb[0].mxu0
    %v1481 = vadd.f32 %v1441, %v1480
    %v1482 = vpop.f32.mrb[0].mxu0
    %v1483 = vpop.f32.mrb[0].mxu0
    %v1484 = vpop.f32.mrb[0].mxu0
    %1485 = vdwg.mxu0
    %v1486 = vtanh.pop %v1481
    %v1487 = vld [vmem:[%s7] sm:$0x1]
    %v1489 = vlaneseq
    %v1490 = vshrl.u32 %v1489, 7
    %v1491 = vsub.s32 0, %v1490
    %v1492 = vrot.slane %v1487, %v1491
    %v1494 = vmul.f32 %v1486, %v1492
    %v1495 = vld [vmem:[%s8] sm:$0x1]
    %v1497 = vlaneseq
    %v1498 = vshrl.u32 %v1497, 7
    %v1499 = vsub.s32 0, %v1498
    %v1500 = vrot.slane %v1495, %v1499
    %v1502 = vadd.f32 %v1494, %v1500
    %1503 = vst [vmem:[#allocation10] sm:$0xff] %v1502
    // Predicated region
    $region54: #{tpu_custom_call.1} parent=1 // pred_check
      _
    $region55: #{tpu_custom_call.1} parent=1 // pred_check_branch
      %1505 = sbr.rel (0) target = $region57
    $region56: #{tpu_custom_call.1} parent=1 // pred_region
      %s1507 = ssub.s32 128, 128
      %1508 = vsyncadd [#allocation4], %s1507
      %s1510 = sshll.u32 [#allocation10], 4
      %s1511 = int_to_ptr.vmem [resolvable:$true] %s1510
      %1513 = dma.vmem_to_hbm [thread:$0]  %s1511, 128, %s9, [#allocation4]
    $region57: #{tpu_custom_call.1} parent=1 // pred_fallthru
      _
    // Predicated region
    $region58: #{tpu_custom_call.1} parent=1 // pred_check
      _
    $region59: #{tpu_custom_call.1} parent=1 // pred_check_branch
      %1515 = sbr.rel (0) target = $region61
    $region60: #{tpu_custom_call.1} parent=1 // pred_region
      %1516 = dma.done [#allocation4], 128
    $region61: #{tpu_custom_call.1} parent=1 // pred_fallthru
      _
    %1517 = vsyncpa [#allocation3], 1
    %1518 = vsyncpa [#allocation6], 1
    %1519 = vsyncpa [#allocation9], 1
    %1520 = vsyncpa [#allocation4], 1

</llo_original>
